<compile_context>
chip_gen: v7x
topology: tpu7x:2x2x1
jax: 0.10.0
libtpu: 0.0.40
codegen_flags: <defaults>
</compile_context>

<pallas_src>
import functools

import jax
import jax.numpy as jnp
from jax.experimental import pallas as pl
from jax.experimental.pallas import tpu as pltpu

HIDDEN = 768          # fixed by the module (nn.Linear(768, label_size))
LABEL_SIZE = 16       # synthetic label_encoder.label_size
BATCH = 2


def _round_up(x, m):
    return ((x + m - 1) // m) * m


def _pick_tb(B, tb_max):
    """Batch tile size.

    B <= 16: one full-array block (no grid, no padding).
    Otherwise: aim for >= 2 grid steps (v7x megacore), rows a multiple of 8
    (f32 sublane), capped at tb_max.
    """
    if B <= 16:
        return B
    tb = _round_up((B + 1) // 2, 8)
    return min(tb, tb_max)


def linear_kernel(x_ref, w_ref, b_ref, o_ref):
    # x_ref: (TB, 768) f32 -> cast to bf16 on the VPU (kernel is DMA-bound,
    #        the cast is free) so only one f32 read of x touches HBM.
    # w_ref: (768, Lp) bf16, constant block index -> resident across the grid.
    # b_ref: (1, Lp) f32 (f32 bias add: safe on v5e, no bf16 VALU there).
    # o_ref: (TB, Lp) bf16, lane-dense (Lp multiple of 128) -> unmasked vst,
    #        half the writeback of f32.
    acc = jnp.dot(x_ref[...].astype(jnp.bfloat16), w_ref[...],
                  preferred_element_type=jnp.float32)
    o_ref[...] = (acc + b_ref[...]).astype(o_ref.dtype)


def prepare_linear_params(w, b):
    """One-time parameter prep (call at model init and cache the result).

    w: (L, 768) f32 weight in PyTorch nn.Linear layout
    b: (L,)    f32 bias
    returns (w_t, b2): (768, Lp) bf16 pre-transposed/padded weight and
                       (1, Lp)  f32 padded bias, Lp = round_up(L, 128).
    """
    L, H = w.shape
    Lp = _round_up(L, 128)
    w_t = jnp.zeros((H, Lp), jnp.bfloat16).at[:, :L].set(w.T.astype(jnp.bfloat16))
    b2 = jnp.zeros((1, Lp), jnp.float32).at[:, :L].set(b.astype(jnp.float32))
    return w_t, b2


@functools.partial(jax.jit, static_argnames=("label_size", "tb_max"))
def nn_model_forward(x, w_t, b2, *, label_size, tb_max=1024):
    """Forward of NNModel: logits = x @ W^T + b.

    x:   (B, 768) f32 batch_inputs
    w_t: (768, Lp) bf16 prepared weight (from prepare_linear_params)
    b2:  (1, Lp)  f32 prepared bias
    returns (B, label_size) f32 logits (bf16 operands, f32 accumulate).
    """
    B, H = x.shape
    Lp = w_t.shape[1]
    TB = _pick_tb(B, tb_max)
    grid = ((B + TB - 1) // TB,)

    out = pl.pallas_call(
        linear_kernel,
        out_shape=jax.ShapeDtypeStruct((B, Lp), jnp.bfloat16),
        grid=grid,
        in_specs=[
            pl.BlockSpec((TB, H), lambda i: (i, 0)),   # stream batch rows (f32)
            pl.BlockSpec((H, Lp), lambda i: (0, 0)),   # weight: constant -> resident
            pl.BlockSpec((1, Lp), lambda i: (0, 0)),   # bias: constant block
        ],
        out_specs=pl.BlockSpec((TB, Lp), lambda i: (i, 0)),
        compiler_params=pltpu.CompilerParams(
            dimension_semantics=("parallel",)),        # v7x: batch across 2 TCs
    )(x, w_t, b2)

    # Fused into the jit: drop label padding, cast back to f32.
    return out[:, :label_size].astype(jnp.float32)


if __name__ == "__main__":
    key = jax.random.PRNGKey(0)
    k_x, k_w, k_b, k_big, k_odd = jax.random.split(key, 5)

    # Deterministic parameter init mimicking nn.Linear default:
    # uniform(-1/sqrt(in_features), 1/sqrt(in_features))
    bound = 1.0 / (HIDDEN ** 0.5)
    w = jax.random.uniform(k_w, (LABEL_SIZE, HIDDEN), jnp.float32, -bound, bound)
    b = jax.random.uniform(k_b, (LABEL_SIZE,), jnp.float32, -bound, bound)

    # One-time prep (model init), cached across forward calls.
    w_t, b2 = prepare_linear_params(w, b)
    w_t, b2 = jax.block_until_ready((w_t, b2))

    def ref_bf16(xx):
        return (jnp.dot(xx.astype(jnp.bfloat16), w.T.astype(jnp.bfloat16),
                        preferred_element_type=jnp.float32) + b[None, :])

    # Small-batch case consistent with the module (batch_inputs: (2, 768)):
    # single full-array block, no padding pass.
    x = jax.random.normal(k_x, (BATCH, HIDDEN), jnp.float32)
    out = jax.block_until_ready(nn_model_forward(x, w_t, b2, label_size=LABEL_SIZE))
    assert out.shape == (BATCH, LABEL_SIZE)
    assert jnp.allclose(out, ref_bf16(x), atol=1e-2, rtol=1e-2)
    # Full-f32 reference (loose; bf16 operand/output quantization ~0.5%).
    assert jnp.allclose(out, x @ w.T + b[None, :], atol=5e-2, rtol=5e-2)

    # Larger batch: 2-step grid (v7x megacore), resident weight, bf16 writeback.
    xb = jax.random.normal(k_big, (512, HIDDEN), jnp.float32)
    out_b = jax.block_until_ready(nn_model_forward(xb, w_t, b2, label_size=LABEL_SIZE))
    assert out_b.shape == (512, LABEL_SIZE)
    assert jnp.allclose(out_b, ref_bf16(xb), atol=1e-2, rtol=1e-2)

    # Ragged batch exercises the partial last block (no host-side row padding).
    xo = jax.random.normal(k_odd, (200, HIDDEN), jnp.float32)
    out_o = jax.block_until_ready(nn_model_forward(xo, w_t, b2, label_size=LABEL_SIZE))
    assert out_o.shape == (200, LABEL_SIZE)
    assert jnp.allclose(out_o, ref_bf16(xo), atol=1e-2, rtol=1e-2)

    print("KERNEL_OK")
</pallas_src>

<mosaic_0001>
module attributes {stable_mosaic.version = 11 : i64} {
  func.func @linear_kernel(%arg0: i32, %arg1: memref<2x768xf32, #tpu.memory_space<vmem>>, %arg2: memref<768x128xbf16, #tpu.memory_space<vmem>>, %arg3: memref<1x128xf32, #tpu.memory_space<vmem>>, %arg4: memref<2x128xbf16, #tpu.memory_space<vmem>>) attributes {dimension_semantics = [#tpu.dimension_semantics<parallel>], iteration_bounds = array<i64: 1>, scalar_prefetch = 0 : i64, scratch_operands = 0 : i64, tpu.core_type = #tpu.core_type<tc>, window_params = [{transform_indices = @transform_0, window_bounds = array<i64: 2, 768>}, {pipeline_mode = #tpu.pipeline_mode<synchronous>, transform_indices = @transform_1, window_bounds = array<i64: 768, 128>}, {pipeline_mode = #tpu.pipeline_mode<synchronous>, transform_indices = @transform_2, window_bounds = array<i64: 1, 128>}, {transform_indices = @transform_3, window_bounds = array<i64: 2, 128>}]} {
    %c0 = arith.constant 0 : index
    %c0_0 = arith.constant 0 : index
    %0 = vector.load %arg1[%c0, %c0_0] : memref<2x768xf32, #tpu.memory_space<vmem>>, vector<2x768xf32>
    %1 = arith.truncf %0 : vector<2x768xf32> to vector<2x768xbf16>
    %c0_1 = arith.constant 0 : index
    %c0_2 = arith.constant 0 : index
    %2 = vector.load %arg2[%c0_1, %c0_2] : memref<768x128xbf16, #tpu.memory_space<vmem>>, vector<768x128xbf16>
    %cst = arith.constant dense<0.000000e+00> : vector<2x128xf32>
    %3 = tpu.matmul %1, %2, %cst {dimension_numbers = #tpu.dot_dimension_numbers<[1], [0], [0], [1], [0, 0, 1, 1], [], []>} : vector<2x768xbf16>, vector<768x128xbf16>, vector<2x128xf32> -> vector<2x128xf32>
    %c0_3 = arith.constant 0 : index
    %c0_4 = arith.constant 0 : index
    %4 = vector.load %arg3[%c0_3, %c0_4] : memref<1x128xf32, #tpu.memory_space<vmem>>, vector<1x128xf32>
    %5 = vector.broadcast %4 : vector<1x128xf32> to vector<2x128xf32>
    %6 = arith.addf %3, %5 : vector<2x128xf32>
    %7 = arith.truncf %6 : vector<2x128xf32> to vector<2x128xbf16>
    %c0_5 = arith.constant 0 : index
    %c0_6 = arith.constant 0 : index
    %8 = vector.load %arg4[%c0_5, %c0_6] : memref<2x128xbf16, #tpu.memory_space<vmem>>, vector<2x128xbf16>
    tpu.vector_store %arg4[%c0_5, %c0_6], %7 {strides = array<i32>} : memref<2x128xbf16, #tpu.memory_space<vmem>>, vector<2x128xbf16>,
    return
  }
  func.func @transform_0(%arg0: i32) -> (i32, i32) {
    %c0_i32 = arith.constant 0 : i32
    %c0_i32_0 = arith.constant 0 : i32
    return %arg0, %c0_i32 : i32, i32
  }
  func.func @transform_1(%arg0: i32) -> (i32, i32) {
    %c0_i32 = arith.constant 0 : i32
    %c0_i32_0 = arith.constant 0 : i32
    %c0_i32_1 = arith.constant 0 : i32
    return %c0_i32, %c0_i32_0 : i32, i32
  }
  func.func @transform_2(%arg0: i32) -> (i32, i32) {
    %c0_i32 = arith.constant 0 : i32
    %c0_i32_0 = arith.constant 0 : i32
    %c0_i32_1 = arith.constant 0 : i32
    return %c0_i32, %c0_i32_0 : i32, i32
  }
  func.func @transform_3(%arg0: i32) -> (i32, i32) {
    %c0_i32 = arith.constant 0 : i32
    %c0_i32_0 = arith.constant 0 : i32
    return %arg0, %c0_i32 : i32, i32
  }
}

</mosaic_0001>

<llo_original>
// kernel: nn_model_forward.1
$region0: #{nn_model_forward.1}
  #allocation0 [shape = 'u32[]', space=smem, size = 0x4, offset = 0x4, fixed_abs, tag = 'smem constant byte address 0x4 - core index']
  #allocation1 [shape = 'u32[144,128]{1,0:T(1,128)}', space=vmem, size = 0x12000, scoped, tag = 'internal scratch']
  %s0 = inlined_call_operand.hbm [shape: f32[2,768], index: 0, kind: input, shape index: {}]
  %s1 = inlined_call_operand.hbm [shape: bf16[768,128], index: 1, kind: input, shape index: {}]
  %s2 = inlined_call_operand.vmem [shape: f32[1,128], index: 2, kind: input, shape index: {}]
  %s3 = inlined_call_operand.vmem [shape: bf16[2,128], index: 3, kind: output, shape index: {}]
  %s4 = sld [smem:[#allocation0]]
  $region30: #{nn_model_forward.1} parent=0
    _
  %s6 = ssub.s32 1, %s4
  %s7 = scalar_select 0, %s6, %s4
  $region1: #{nn_model_forward.1} parent=0
    #allocation2 [shape = 'u8[6144]{0}', space=vmem, size = 0x1800, scoped, tag = 'input window, operand 0, single buffered']
    #allocation3 [shape = 's32[1]{0}', space=sflag, size = 0x4, scoped, tag = 'scoped memory for nn_model_forward.1']
    #allocation4 [shape = 'u8[196608]{0}', space=vmem, size = 0x30000, scoped, tag = 'input window, operand 1, single buffered']
    #allocation5 [shape = 's32[1]{0}', space=sflag, size = 0x4, scoped, tag = 'scoped memory for nn_model_forward.1']
    %8 = vsyncpa [#allocation3], 0
    %9 = vsyncpa [#allocation5], 0
    // Predicated region
    $region2: #{nn_model_forward.1} parent=1 // pred_check
      _
    $region3: #{nn_model_forward.1} parent=1 // pred_check_branch
      %11 = sbr.rel (0) target = $region5
    $region4: #{nn_model_forward.1} parent=1 // pred_region
      %s13 = ssub.s32 192, 192
      %14 = vsyncadd [#allocation3], %s13
      %s16 = sshll.u32 [#allocation2], 4
      %s17 = int_to_ptr.vmem [resolvable:$true] %s16
      %19 = dma.hbm_to_vmem [thread:$0]  %s0, 192, %s17, [#allocation3]
    $region5: #{nn_model_forward.1} parent=1 // pred_fallthru
      _
    // Predicated region
    $region6: #{nn_model_forward.1} parent=1 // pred_check
      _
    $region7: #{nn_model_forward.1} parent=1 // pred_check_branch
      %21 = sbr.rel (0) target = $region9
    $region8: #{nn_model_forward.1} parent=1 // pred_region
      %s23 = ssub.s32 6144, 6144
      %24 = vsyncadd [#allocation5], %s23
      %s25 = sshll.u32 [#allocation4], 4
      %s26 = int_to_ptr.vmem [resolvable:$true] %s25
      %31 = dma.hbm_to_vmem [thread:$0]  %s1, 6144, %s26, [#allocation5], 64, 64, 4
    $region9: #{nn_model_forward.1} parent=1 // pred_fallthru
      _
    // Predicated region
    $region10: #{nn_model_forward.1} parent=1 // pred_check
      _
    $region11: #{nn_model_forward.1} parent=1 // pred_check_branch
      %33 = sbr.rel (0) target = $region13
    $region12: #{nn_model_forward.1} parent=1 // pred_region
      _
    $region13: #{nn_model_forward.1} parent=1 // pred_fallthru
      _
    // Predicated region
    $region14: #{nn_model_forward.1} parent=1 // pred_check
      _
    $region15: #{nn_model_forward.1} parent=1 // pred_check_branch
      %35 = sbr.rel (0) target = $region17
    $region16: #{nn_model_forward.1} parent=1 // pred_region
      %36 = dma.done [#allocation3], 192
    $region17: #{nn_model_forward.1} parent=1 // pred_fallthru
      _
    // Predicated region
    $region18: #{nn_model_forward.1} parent=1 // pred_check
      _
    $region19: #{nn_model_forward.1} parent=1 // pred_check_branch
      %38 = sbr.rel (0) target = $region21
    $region20: #{nn_model_forward.1} parent=1 // pred_region
      %39 = dma.done [#allocation5], 6144
    $region21: #{nn_model_forward.1} parent=1 // pred_fallthru
      _
    %v41 = vld [vmem:[#allocation2] sm:$0xff]
    %v42 = vld [vmem:[#allocation2 + $0x8] sm:$0xf]
    %v45 = vcombine.high %v41, %v41
    %v47 = vunpack.c.l.s4 1983009808
    %v48 = vunpack.c.0.s8 %v47
    %v49 = vlaneseq
    %v50 = vshrl.u32 %v49, 7
    %v51 = vsub.s32 %v48, %v50
    %v52 = vrot.slane %v41, %v51
    %v54 = vunpack.c.l.s4 1983009808
    %v55 = vunpack.c.0.s8 %v54
    %v56 = vlaneseq
    %v57 = vshrl.u32 %v56, 7
    %v58 = vsub.s32 %v55, %v57
    %v59 = vrot.slane %v45, %v58
    %v60 = vcombine.high %v52, %v52
    %v61 = vcombine.high %v59, %v59
    %v63 = vunpack.c.l.s4 1983009808
    %v64 = vunpack.c.0.s8 %v63
    %v65 = vlaneseq
    %v66 = vshrl.u32 %v65, 7
    %v67 = vsub.s32 %v64, %v66
    %v68 = vrot.slane %v42, %v67
    %v69 = vcombine.high %v68, %v68
    %v76 = vpack.c.bf16 %v52, %v52
    %v77 = vpack.c.bf16 %v60, %v60
    %v78 = vpack.c.bf16 %v59, %v59
    %v79 = vpack.c.bf16 %v61, %v61
    %v80 = vpack.c.bf16 %v68, %v68
    %v81 = vpack.c.bf16 %v69, %v69
    %v82 = vld [vmem:[#allocation4] sm:$0xf]
    %v83 = vld [vmem:[#allocation4 + $0x4] sm:$0xf]
    %v84 = vld [vmem:[#allocation4 + $0x8] sm:$0xf]
    %v85 = vld [vmem:[#allocation4 + $0xc] sm:$0xf]
    %v86 = vld [vmem:[#allocation4 + $0x10] sm:$0xf]
    %v87 = vld [vmem:[#allocation4 + $0x14] sm:$0xf]
    %v88 = vld [vmem:[#allocation4 + $0x18] sm:$0xf]
    %v89 = vld [vmem:[#allocation4 + $0x1c] sm:$0xf]
    %v90 = vld [vmem:[#allocation4 + $0x20] sm:$0xf]
    %v91 = vld [vmem:[#allocation4 + $0x24] sm:$0xf]
    %v92 = vld [vmem:[#allocation4 + $0x28] sm:$0xf]
    %v93 = vld [vmem:[#allocation4 + $0x2c] sm:$0xf]
    %v94 = vld [vmem:[#allocation4 + $0x30] sm:$0xf]
    %v95 = vld [vmem:[#allocation4 + $0x34] sm:$0xf]
    %v96 = vld [vmem:[#allocation4 + $0x38] sm:$0xf]
    %v97 = vld [vmem:[#allocation4 + $0x3c] sm:$0xf]
    %v98 = vld [vmem:[#allocation4 + $0x40] sm:$0xf]
    %v99 = vld [vmem:[#allocation4 + $0x44] sm:$0xf]
    %v100 = vld [vmem:[#allocation4 + $0x48] sm:$0xf]
    %v101 = vld [vmem:[#allocation4 + $0x4c] sm:$0xf]
    %v102 = vld [vmem:[#allocation4 + $0x50] sm:$0xf]
    %v103 = vld [vmem:[#allocation4 + $0x54] sm:$0xf]
    %v104 = vld [vmem:[#allocation4 + $0x58] sm:$0xf]
    %v105 = vld [vmem:[#allocation4 + $0x5c] sm:$0xf]
    %v106 = vld [vmem:[#allocation4 + $0x60] sm:$0xf]
    %v107 = vld [vmem:[#allocation4 + $0x64] sm:$0xf]
    %v108 = vld [vmem:[#allocation4 + $0x68] sm:$0xf]
    %v109 = vld [vmem:[#allocation4 + $0x6c] sm:$0xf]
    %v110 = vld [vmem:[#allocation4 + $0x70] sm:$0xf]
    %v111 = vld [vmem:[#allocation4 + $0x74] sm:$0xf]
    %v112 = vld [vmem:[#allocation4 + $0x78] sm:$0xf]
    %v113 = vld [vmem:[#allocation4 + $0x7c] sm:$0xf]
    %v114 = vld [vmem:[#allocation4 + $0x80] sm:$0xf]
    %v115 = vld [vmem:[#allocation4 + $0x84] sm:$0xf]
    %v116 = vld [vmem:[#allocation4 + $0x88] sm:$0xf]
    %v117 = vld [vmem:[#allocation4 + $0x8c] sm:$0xf]
    %v118 = vld [vmem:[#allocation4 + $0x90] sm:$0xf]
    %v119 = vld [vmem:[#allocation4 + $0x94] sm:$0xf]
    %v120 = vld [vmem:[#allocation4 + $0x98] sm:$0xf]
    %v121 = vld [vmem:[#allocation4 + $0x9c] sm:$0xf]
    %v122 = vld [vmem:[#allocation4 + $0xa0] sm:$0xf]
    %v123 = vld [vmem:[#allocation4 + $0xa4] sm:$0xf]
    %v124 = vld [vmem:[#allocation4 + $0xa8] sm:$0xf]
    %v125 = vld [vmem:[#allocation4 + $0xac] sm:$0xf]
    %v126 = vld [vmem:[#allocation4 + $0xb0] sm:$0xf]
    %v127 = vld [vmem:[#allocation4 + $0xb4] sm:$0xf]
    %v128 = vld [vmem:[#allocation4 + $0xb8] sm:$0xf]
    %v129 = vld [vmem:[#allocation4 + $0xbc] sm:$0xf]
    %v130 = vld [vmem:[#allocation4 + $0xc0] sm:$0xf]
    %v131 = vld [vmem:[#allocation4 + $0xc4] sm:$0xf]
    %v132 = vld [vmem:[#allocation4 + $0xc8] sm:$0xf]
    %v133 = vld [vmem:[#allocation4 + $0xcc] sm:$0xf]
    %v134 = vld [vmem:[#allocation4 + $0xd0] sm:$0xf]
    %v135 = vld [vmem:[#allocation4 + $0xd4] sm:$0xf]
    %v136 = vld [vmem:[#allocation4 + $0xd8] sm:$0xf]
    %v137 = vld [vmem:[#allocation4 + $0xdc] sm:$0xf]
    %v138 = vld [vmem:[#allocation4 + $0xe0] sm:$0xf]
    %v139 = vld [vmem:[#allocation4 + $0xe4] sm:$0xf]
    %v140 = vld [vmem:[#allocation4 + $0xe8] sm:$0xf]
    %v141 = vld [vmem:[#allocation4 + $0xec] sm:$0xf]
    %v142 = vld [vmem:[#allocation4 + $0xf0] sm:$0xf]
    %v143 = vld [vmem:[#allocation4 + $0xf4] sm:$0xf]
    %v144 = vld [vmem:[#allocation4 + $0xf8] sm:$0xf]
    %v145 = vld [vmem:[#allocation4 + $0xfc] sm:$0xf]
    %v146 = vld [vmem:[#allocation4 + $0x100] sm:$0xf]
    %v147 = vld [vmem:[#allocation4 + $0x104] sm:$0xf]
    %v148 = vld [vmem:[#allocation4 + $0x108] sm:$0xf]
    %v149 = vld [vmem:[#allocation4 + $0x10c] sm:$0xf]
    %v150 = vld [vmem:[#allocation4 + $0x110] sm:$0xf]
    %v151 = vld [vmem:[#allocation4 + $0x114] sm:$0xf]
    %v152 = vld [vmem:[#allocation4 + $0x118] sm:$0xf]
    %v153 = vld [vmem:[#allocation4 + $0x11c] sm:$0xf]
    %v154 = vld [vmem:[#allocation4 + $0x120] sm:$0xf]
    %v155 = vld [vmem:[#allocation4 + $0x124] sm:$0xf]
    %v156 = vld [vmem:[#allocation4 + $0x128] sm:$0xf]
    %v157 = vld [vmem:[#allocation4 + $0x12c] sm:$0xf]
    %v158 = vld [vmem:[#allocation4 + $0x130] sm:$0xf]
    %v159 = vld [vmem:[#allocation4 + $0x134] sm:$0xf]
    %v160 = vld [vmem:[#allocation4 + $0x138] sm:$0xf]
    %v161 = vld [vmem:[#allocation4 + $0x13c] sm:$0xf]
    %v162 = vld [vmem:[#allocation4 + $0x140] sm:$0xf]
    %v163 = vld [vmem:[#allocation4 + $0x144] sm:$0xf]
    %v164 = vld [vmem:[#allocation4 + $0x148] sm:$0xf]
    %v165 = vld [vmem:[#allocation4 + $0x14c] sm:$0xf]
    %v166 = vld [vmem:[#allocation4 + $0x150] sm:$0xf]
    %v167 = vld [vmem:[#allocation4 + $0x154] sm:$0xf]
    %v168 = vld [vmem:[#allocation4 + $0x158] sm:$0xf]
    %v169 = vld [vmem:[#allocation4 + $0x15c] sm:$0xf]
    %v170 = vld [vmem:[#allocation4 + $0x160] sm:$0xf]
    %v171 = vld [vmem:[#allocation4 + $0x164] sm:$0xf]
    %v172 = vld [vmem:[#allocation4 + $0x168] sm:$0xf]
    %v173 = vld [vmem:[#allocation4 + $0x16c] sm:$0xf]
    %v174 = vld [vmem:[#allocation4 + $0x170] sm:$0xf]
    %v175 = vld [vmem:[#allocation4 + $0x174] sm:$0xf]
    %v176 = vld [vmem:[#allocation4 + $0x178] sm:$0xf]
    %v177 = vld [vmem:[#allocation4 + $0x17c] sm:$0xf]
    %v178 = vld [vmem:[%s2] sm:$0x1]
    %v180 = vlaneseq
    %v181 = vshrl.u32 %v180, 7
    %v182 = vsub.s32 0, %v181
    %v183 = vrot.slane %v178, %v182
    %v281 = vunpack.c.l.b16 %v82
    %v282 = vunpack.c.l.b16 %v83
    %v283 = vunpack.c.l.b16 %v84
    %v284 = vunpack.c.l.b16 %v85
    %v285 = vunpack.c.l.b16 %v86
    %v286 = vunpack.c.l.b16 %v87
    %v287 = vunpack.c.l.b16 %v88
    %v288 = vunpack.c.l.b16 %v89
    %v289 = vunpack.c.l.b16 %v90
    %v290 = vunpack.c.l.b16 %v91
    %v291 = vunpack.c.l.b16 %v92
    %v292 = vunpack.c.l.b16 %v93
    %v293 = vunpack.c.l.b16 %v94
    %v294 = vunpack.c.l.b16 %v95
    %v295 = vunpack.c.l.b16 %v96
    %v296 = vunpack.c.l.b16 %v97
    %v297 = vunpack.c.l.b16 %v98
    %v298 = vunpack.c.l.b16 %v99
    %v299 = vunpack.c.l.b16 %v100
    %v300 = vunpack.c.l.b16 %v101
    %v301 = vunpack.c.l.b16 %v102
    %v302 = vunpack.c.l.b16 %v103
    %v303 = vunpack.c.l.b16 %v104
    %v304 = vunpack.c.l.b16 %v105
    %v305 = vunpack.c.l.b16 %v106
    %v306 = vunpack.c.l.b16 %v107
    %v307 = vunpack.c.l.b16 %v108
    %v308 = vunpack.c.l.b16 %v109
    %v309 = vunpack.c.l.b16 %v110
    %v310 = vunpack.c.l.b16 %v111
    %v311 = vunpack.c.l.b16 %v112
    %v312 = vunpack.c.l.b16 %v113
    %v313 = vunpack.c.l.b16 %v114
    %v314 = vunpack.c.l.b16 %v115
    %v315 = vunpack.c.l.b16 %v116
    %v316 = vunpack.c.l.b16 %v117
    %v317 = vunpack.c.l.b16 %v118
    %v318 = vunpack.c.l.b16 %v119
    %v319 = vunpack.c.l.b16 %v120
    %v320 = vunpack.c.l.b16 %v121
    %v321 = vunpack.c.l.b16 %v122
    %v322 = vunpack.c.l.b16 %v123
    %v323 = vunpack.c.l.b16 %v124
    %v324 = vunpack.c.l.b16 %v125
    %v325 = vunpack.c.l.b16 %v126
    %v326 = vunpack.c.l.b16 %v127
    %v327 = vunpack.c.l.b16 %v128
    %v328 = vunpack.c.l.b16 %v129
    %v329 = vunpack.c.l.b16 %v130
    %v330 = vunpack.c.l.b16 %v131
    %v331 = vunpack.c.l.b16 %v132
    %v332 = vunpack.c.l.b16 %v133
    %v333 = vunpack.c.l.b16 %v134
    %v334 = vunpack.c.l.b16 %v135
    %v335 = vunpack.c.l.b16 %v136
    %v336 = vunpack.c.l.b16 %v137
    %v337 = vunpack.c.l.b16 %v138
    %v338 = vunpack.c.l.b16 %v139
    %v339 = vunpack.c.l.b16 %v140
    %v340 = vunpack.c.l.b16 %v141
    %v341 = vunpack.c.l.b16 %v142
    %v342 = vunpack.c.l.b16 %v143
    %v343 = vunpack.c.l.b16 %v144
    %v344 = vunpack.c.l.b16 %v145
    %v345 = vunpack.c.l.b16 %v146
    %v346 = vunpack.c.l.b16 %v147
    %v347 = vunpack.c.l.b16 %v148
    %v348 = vunpack.c.l.b16 %v149
    %v349 = vunpack.c.l.b16 %v150
    %v350 = vunpack.c.l.b16 %v151
    %v351 = vunpack.c.l.b16 %v152
    %v352 = vunpack.c.l.b16 %v153
    %v353 = vunpack.c.l.b16 %v154
    %v354 = vunpack.c.l.b16 %v155
    %v355 = vunpack.c.l.b16 %v156
    %v356 = vunpack.c.l.b16 %v157
    %v357 = vunpack.c.l.b16 %v158
    %v358 = vunpack.c.l.b16 %v159
    %v359 = vunpack.c.l.b16 %v160
    %v360 = vunpack.c.l.b16 %v161
    %v361 = vunpack.c.l.b16 %v162
    %v362 = vunpack.c.l.b16 %v163
    %v363 = vunpack.c.l.b16 %v164
    %v364 = vunpack.c.l.b16 %v165
    %v365 = vunpack.c.l.b16 %v166
    %v366 = vunpack.c.l.b16 %v167
    %v367 = vunpack.c.l.b16 %v168
    %v368 = vunpack.c.l.b16 %v169
    %v369 = vunpack.c.l.b16 %v170
    %v370 = vunpack.c.l.b16 %v171
    %v371 = vunpack.c.l.b16 %v172
    %v372 = vunpack.c.l.b16 %v173
    %v373 = vunpack.c.l.b16 %v174
    %v374 = vunpack.c.l.b16 %v175
    %v375 = vunpack.c.l.b16 %v176
    %v376 = vunpack.c.l.b16 %v177
    %v377 = vpack.c.b16 %v282, %v281
    %v378 = vpack.c.b16 %v284, %v283
    %v379 = vpack.c.b16 %v286, %v285
    %v380 = vpack.c.b16 %v288, %v287
    %v381 = vpack.c.b16 %v290, %v289
    %v382 = vpack.c.b16 %v292, %v291
    %v383 = vpack.c.b16 %v294, %v293
    %v384 = vpack.c.b16 %v296, %v295
    %v385 = vpack.c.b16 %v298, %v297
    %v386 = vpack.c.b16 %v300, %v299
    %v387 = vpack.c.b16 %v302, %v301
    %v388 = vpack.c.b16 %v304, %v303
    %v389 = vpack.c.b16 %v306, %v305
    %v390 = vpack.c.b16 %v308, %v307
    %v391 = vpack.c.b16 %v310, %v309
    %v392 = vpack.c.b16 %v312, %v311
    %v393 = vpack.c.b16 %v314, %v313
    %v394 = vpack.c.b16 %v316, %v315
    %v395 = vpack.c.b16 %v318, %v317
    %v396 = vpack.c.b16 %v320, %v319
    %v397 = vpack.c.b16 %v322, %v321
    %v398 = vpack.c.b16 %v324, %v323
    %v399 = vpack.c.b16 %v326, %v325
    %v400 = vpack.c.b16 %v328, %v327
    %v401 = vpack.c.b16 %v330, %v329
    %v402 = vpack.c.b16 %v332, %v331
    %v403 = vpack.c.b16 %v334, %v333
    %v404 = vpack.c.b16 %v336, %v335
    %v405 = vpack.c.b16 %v338, %v337
    %v406 = vpack.c.b16 %v340, %v339
    %v407 = vpack.c.b16 %v342, %v341
    %v408 = vpack.c.b16 %v344, %v343
    %v409 = vpack.c.b16 %v346, %v345
    %v410 = vpack.c.b16 %v348, %v347
    %v411 = vpack.c.b16 %v350, %v349
    %v412 = vpack.c.b16 %v352, %v351
    %v413 = vpack.c.b16 %v354, %v353
    %v414 = vpack.c.b16 %v356, %v355
    %v415 = vpack.c.b16 %v358, %v357
    %v416 = vpack.c.b16 %v360, %v359
    %v417 = vpack.c.b16 %v362, %v361
    %v418 = vpack.c.b16 %v364, %v363
    %v419 = vpack.c.b16 %v366, %v365
    %v420 = vpack.c.b16 %v368, %v367
    %v421 = vpack.c.b16 %v370, %v369
    %v422 = vpack.c.b16 %v372, %v371
    %v423 = vpack.c.b16 %v374, %v373
    %v424 = vpack.c.b16 %v376, %v375
    %473 = vmatprep.subr.bf16.mxu0 0
    %474 = vmatpush1.bf16.msra.mxu0 %v377
    %475 = vmatprep.subr.bf16.mxu0 0
    %476 = vmatpush1.bf16.msra.mxu0 %v378
    %477 = vmatprep.subr.bf16.mxu0 0
    %478 = vmatpush1.bf16.msra.mxu0 %v379
    %479 = vmatprep.subr.bf16.mxu0 0
    %480 = vmatpush1.bf16.msra.mxu0 %v380
    %481 = vmatprep.subr.bf16.mxu0 0
    %482 = vmatpush1.bf16.msra.mxu0 %v381
    %483 = vmatprep.subr.bf16.mxu0 0
    %484 = vmatpush1.bf16.msra.mxu0 %v382
    %485 = vmatprep.subr.bf16.mxu0 0
    %486 = vmatpush1.bf16.msra.mxu0 %v383
    %487 = vmatprep.subr.bf16.mxu0 0
    %488 = vmatpush1.bf16.msra.mxu0 %v384
    %489 = vmatprep.subr.bf16.mxu0 0
    %490 = vmatpush1.bf16.msra.mxu0 %v385
    %491 = vmatprep.subr.bf16.mxu0 0
    %492 = vmatpush1.bf16.msra.mxu0 %v386
    %493 = vmatprep.subr.bf16.mxu0 0
    %494 = vmatpush1.bf16.msra.mxu0 %v387
    %495 = vmatprep.subr.bf16.mxu0 0
    %496 = vmatpush1.bf16.msra.mxu0 %v388
    %497 = vmatprep.subr.bf16.mxu0 0
    %498 = vmatpush1.bf16.msra.mxu0 %v389
    %499 = vmatprep.subr.bf16.mxu0 0
    %500 = vmatpush1.bf16.msra.mxu0 %v390
    %501 = vmatprep.subr.bf16.mxu0 0
    %502 = vmatpush1.bf16.msra.mxu0 %v391
    %503 = vmatprep.subr.bf16.mxu0 0
    %504 = vmatpush1.bf16.msra.mxu0 %v392
    %505 = vmatprep.mubr.bf16.mxu0 %v77
    %506 = vmatmul.mubr.bf16.gmra.mrb[0].mxu0 %v76
    %v507 = vpop.f32.mrb[0].mxu0
    %v508 = vadd.f32 %v183, %v507
    %v509 = vpop.f32.mrb[0].mxu0
    %v510 = vpop.f32.mrb[0].mxu0
    %v511 = vpop.f32.mrb[0].mxu0
    %512 = vdwg.mxu0
    %513 = vmatprep.subr.bf16.mxu0 0
    %514 = vmatpush1.bf16.msra.mxu0 %v393
    %515 = vmatprep.subr.bf16.mxu0 0
    %516 = vmatpush1.bf16.msra.mxu0 %v394
    %517 = vmatprep.subr.bf16.mxu0 0
    %518 = vmatpush1.bf16.msra.mxu0 %v395
    %519 = vmatprep.subr.bf16.mxu0 0
    %520 = vmatpush1.bf16.msra.mxu0 %v396
    %521 = vmatprep.subr.bf16.mxu0 0
    %522 = vmatpush1.bf16.msra.mxu0 %v397
    %523 = vmatprep.subr.bf16.mxu0 0
    %524 = vmatpush1.bf16.msra.mxu0 %v398
    %525 = vmatprep.subr.bf16.mxu0 0
    %526 = vmatpush1.bf16.msra.mxu0 %v399
    %527 = vmatprep.subr.bf16.mxu0 0
    %528 = vmatpush1.bf16.msra.mxu0 %v400
    %529 = vmatprep.subr.bf16.mxu0 0
    %530 = vmatpush1.bf16.msra.mxu0 %v401
    %531 = vmatprep.subr.bf16.mxu0 0
    %532 = vmatpush1.bf16.msra.mxu0 %v402
    %533 = vmatprep.subr.bf16.mxu0 0
    %534 = vmatpush1.bf16.msra.mxu0 %v403
    %535 = vmatprep.subr.bf16.mxu0 0
    %536 = vmatpush1.bf16.msra.mxu0 %v404
    %537 = vmatprep.subr.bf16.mxu0 0
    %538 = vmatpush1.bf16.msra.mxu0 %v405
    %539 = vmatprep.subr.bf16.mxu0 0
    %540 = vmatpush1.bf16.msra.mxu0 %v406
    %541 = vmatprep.subr.bf16.mxu0 0
    %542 = vmatpush1.bf16.msra.mxu0 %v407
    %543 = vmatprep.subr.bf16.mxu0 0
    %544 = vmatpush1.bf16.msra.mxu0 %v408
    %545 = vmatprep.mubr.bf16.mxu0 %v79
    %546 = vmatmul.mubr.bf16.gmra.mrb[0].mxu0 %v78
    %v547 = vpop.f32.mrb[0].mxu0
    %v548 = vadd.f32 %v508, %v547
    %v549 = vpop.f32.mrb[0].mxu0
    %v550 = vpop.f32.mrb[0].mxu0
    %v551 = vpop.f32.mrb[0].mxu0
    %552 = vdwg.mxu0
    %553 = vmatprep.subr.bf16.mxu0 0
    %554 = vmatpush1.bf16.msra.mxu0 %v409
    %555 = vmatprep.subr.bf16.mxu0 0
    %556 = vmatpush1.bf16.msra.mxu0 %v410
    %557 = vmatprep.subr.bf16.mxu0 0
    %558 = vmatpush1.bf16.msra.mxu0 %v411
    %559 = vmatprep.subr.bf16.mxu0 0
    %560 = vmatpush1.bf16.msra.mxu0 %v412
    %561 = vmatprep.subr.bf16.mxu0 0
    %562 = vmatpush1.bf16.msra.mxu0 %v413
    %563 = vmatprep.subr.bf16.mxu0 0
    %564 = vmatpush1.bf16.msra.mxu0 %v414
    %565 = vmatprep.subr.bf16.mxu0 0
    %566 = vmatpush1.bf16.msra.mxu0 %v415
    %567 = vmatprep.subr.bf16.mxu0 0
    %568 = vmatpush1.bf16.msra.mxu0 %v416
    %569 = vmatprep.subr.bf16.mxu0 0
    %570 = vmatpush1.bf16.msra.mxu0 %v417
    %571 = vmatprep.subr.bf16.mxu0 0
    %572 = vmatpush1.bf16.msra.mxu0 %v418
    %573 = vmatprep.subr.bf16.mxu0 0
    %574 = vmatpush1.bf16.msra.mxu0 %v419
    %575 = vmatprep.subr.bf16.mxu0 0
    %576 = vmatpush1.bf16.msra.mxu0 %v420
    %577 = vmatprep.subr.bf16.mxu0 0
    %578 = vmatpush1.bf16.msra.mxu0 %v421
    %579 = vmatprep.subr.bf16.mxu0 0
    %580 = vmatpush1.bf16.msra.mxu0 %v422
    %581 = vmatprep.subr.bf16.mxu0 0
    %582 = vmatpush1.bf16.msra.mxu0 %v423
    %583 = vmatprep.subr.bf16.mxu0 0
    %584 = vmatpush1.bf16.msra.mxu0 %v424
    %585 = vmatprep.mubr.bf16.mxu0 %v81
    %586 = vmatmul.mubr.bf16.gmra.mrb[0].mxu0 %v80
    %v587 = vpop.f32.mrb[0].mxu0
    %v588 = vadd.f32 %v548, %v587
    %v589 = vpop.f32.mrb[0].mxu0
    %v590 = vpop.f32.mrb[0].mxu0
    %v591 = vpop.f32.mrb[0].mxu0
    %592 = vdwg.mxu0
    %v593 = vpack.c.bf16 %v588, %v588
    %594 = vst [vmem:[%s3] sm:$0x1] %v593
    // Predicated region
    $region22: #{nn_model_forward.1} parent=1 // pred_check
      _
    $region23: #{nn_model_forward.1} parent=1 // pred_check_branch
      %596 = sbr.rel (0) target = $region25
    $region24: #{nn_model_forward.1} parent=1 // pred_region
      _
    $region25: #{nn_model_forward.1} parent=1 // pred_fallthru
      _
    // Predicated region
    $region26: #{nn_model_forward.1} parent=1 // pred_check
      _
    $region27: #{nn_model_forward.1} parent=1 // pred_check_branch
      %598 = sbr.rel (0) target = $region29
    $region28: #{nn_model_forward.1} parent=1 // pred_region
      _
    $region29: #{nn_model_forward.1} parent=1 // pred_fallthru
      _
    %599 = vsyncpa [#allocation3], 1
    %600 = vsyncpa [#allocation5], 1

</llo_original>
